<compile_context>
chip_gen: v7x
topology: tpu7x:2x2x1
jax: 0.10.0
libtpu: 0.0.40
codegen_flags: <defaults>
</compile_context>

<pallas_src>
import functools

import jax
import jax.numpy as jnp
from jax import lax
from jax.experimental import pallas as pl
from jax.experimental.pallas import tpu as pltpu


def _round_up(n, m):
    return ((n + m - 1) // m) * m


def _ctrnn_kernel(x_ref, w_in_ref, b_ref, w_rec_ref, h0_ref, out_ref,
                  h_scratch, u_scratch, *, t_blk, batch_blk, oneminusalpha,
                  compute_dtype, unroll):
    # Reset the hidden-state carry at the start of every sequence: time is the
    # innermost grid axis, so gate on program_id(1) (works per batch tile and
    # per core when the batch axis is sharded across TensorCores).
    @pl.when(pl.program_id(1) == 0)
    def _():
        h_scratch[...] = h0_ref[...]

    # ---- Fused input projection for the whole time block (one MXU call). ----
    # u[t] = x[t] @ (W_in^T * alpha) + (b_in + b_hh) * alpha, f32 accumulation.
    in_sz = x_ref.shape[-1]
    x2d = x_ref[...].astype(compute_dtype).reshape(t_blk * batch_blk, in_sz)
    u2d = jnp.dot(x2d, w_in_ref[...], preferred_element_type=jnp.float32)
    u_scratch[...] = (u2d + b_ref[...]).reshape(t_blk, batch_blk, -1)

    # W_rec is (hidden_p, hidden_p), alpha pre-folded, compute_dtype. Hoisted
    # load; single-buffered (constant index map + pl.Buffered(1)).
    w = w_rec_ref[...]

    def step(i, h):
        # Recurrent matmul on the MXU (f32 accumulation).
        rec = jnp.dot(h.astype(compute_dtype), w,
                      preferred_element_type=jnp.float32)
        h_new = jnp.maximum(h * oneminusalpha + rec + u_scratch[i], 0.0)
        out_ref[i] = h_new
        return h_new

    h = lax.fori_loop(0, t_blk, step, h_scratch[...], unroll=unroll)
    h_scratch[...] = h


def ei_ctrnn_forward(x, w_in, b_in, w_hh, b_hh, h0, *, alpha, t_blk=16,
                     batch_tile=None, compute_dtype=jnp.bfloat16):
    """x: (seq, batch, input); w_in: (hidden, input); w_hh: (hidden, hidden)."""
    seq_len, batch, input_size = x.shape
    hidden = w_in.shape[0]
    oneminusalpha = 1.0 - alpha
    compute_dtype = jnp.dtype(compute_dtype)

    # ---- alpha folded into weights / bias at trace time. ----
    w_in_k = (w_in.T * alpha).astype(compute_dtype)        # (input, hidden)
    w_rec = (w_hh.T * alpha).astype(compute_dtype)         # (hidden, hidden)
    bias = ((b_in + b_hh) * alpha).astype(jnp.float32)     # (hidden,)

    # ---- Lane/sublane-dense padding (exact after slicing: padded hidden
    # columns stay zero, padded batch rows / time steps never mix with real
    # ones and are sliced off). ----
    hidden_p = _round_up(hidden, 128)
    if batch_tile is None:
        bp8 = _round_up(batch, 8)
        # Single tile keeps the weight read from VMEM once per time step on
        # 1-TC chips; split only when each tile still has >=128 MXU rows.
        batch_tile = bp8 if bp8 <= 128 else 128
    else:
        batch_tile = _round_up(batch_tile, 8)
    batch_p = _round_up(batch, batch_tile)
    num_batch_tiles = batch_p // batch_tile
    seq_p = _round_up(seq_len, t_blk)
    num_time_blocks = seq_p // t_blk
    unroll = max(1, min(t_blk, 8))

    x_p = jnp.pad(x.astype(jnp.float32),
                  ((0, seq_p - seq_len), (0, batch_p - batch), (0, 0)))
    w_in_p = jnp.pad(w_in_k, ((0, 0), (0, hidden_p - hidden)))
    w_rec_p = jnp.pad(w_rec, ((0, hidden_p - hidden), (0, hidden_p - hidden)))
    bias_p = jnp.pad(bias, (0, hidden_p - hidden)).reshape(1, hidden_p)
    h0_p = jnp.pad(h0.astype(jnp.float32),
                   ((0, batch_p - batch), (0, hidden_p - hidden)))

    # ---- VMEM budget: raise the scoped limit only when actually needed,
    # capped by the device's physical VMEM minus headroom. ----
    csz = compute_dtype.itemsize
    x_slab = t_blk * batch_tile * input_size * 4
    out_slab = t_blk * batch_tile * hidden_p * 4
    hvec = batch_tile * hidden_p * 4
    est_vmem = (2 * x_slab + 2 * out_slab            # double-buffered slabs
                + hidden_p * hidden_p * csz          # W_rec (Buffered(1))
                + input_size * hidden_p * csz        # W_in  (Buffered(1))
                + hidden_p * 4                       # bias  (Buffered(1))
                + 2 * hvec                           # h0 (double-buffered)
                + hvec                               # h_scratch
                + t_blk * batch_tile * hidden_p * 4)  # u_scratch
    cp_kwargs = dict(dimension_semantics=("parallel", "arbitrary"))
    if est_vmem > 12 * 1024 * 1024:   # v5e scoped default is 16 MiB
        try:
            vmem_cap = int(pltpu.get_tpu_info().vmem_capacity_bytes)
        except Exception:
            vmem_cap = 64 * 1024 * 1024   # most conservative (v7x per-core)
        cp_kwargs["vmem_limit_bytes"] = min(int(est_vmem * 5 // 4),
                                            vmem_cap - 8 * 1024 * 1024)

    kernel = functools.partial(_ctrnn_kernel, t_blk=t_blk, batch_blk=batch_tile,
                               oneminusalpha=oneminusalpha,
                               compute_dtype=compute_dtype, unroll=unroll)

    out_p = pl.pallas_call(
        kernel,
        out_shape=jax.ShapeDtypeStruct((seq_p, batch_p, hidden_p), jnp.float32),
        grid_spec=pltpu.PrefetchScalarGridSpec(
            num_scalar_prefetch=0,
            grid=(num_batch_tiles, num_time_blocks),
            in_specs=[
                pl.BlockSpec((t_blk, batch_tile, input_size),
                             lambda bi, tb: (tb, bi, 0)),
                pl.BlockSpec((input_size, hidden_p), lambda bi, tb: (0, 0),
                             pipeline_mode=pl.Buffered(1)),
                pl.BlockSpec((1, hidden_p), lambda bi, tb: (0, 0),
                             pipeline_mode=pl.Buffered(1)),
                pl.BlockSpec((hidden_p, hidden_p), lambda bi, tb: (0, 0),
                             pipeline_mode=pl.Buffered(1)),
                pl.BlockSpec((batch_tile, hidden_p), lambda bi, tb: (bi, 0)),
            ],
            out_specs=pl.BlockSpec((t_blk, batch_tile, hidden_p),
                                   lambda bi, tb: (tb, bi, 0)),
            scratch_shapes=[
                pltpu.VMEM((batch_tile, hidden_p), jnp.float32),
                pltpu.VMEM((t_blk, batch_tile, hidden_p), jnp.float32),
            ],
        ),
        compiler_params=pltpu.CompilerParams(**cp_kwargs),
    )(x_p, w_in_p, bias_p, w_rec_p, h0_p)

    out = out_p[:seq_len, :batch, :hidden]
    h_last = out[seq_len - 1]      # hidden after the last real time step
    return out, h_last


def ei_ctrnn_reference(x, w_in, b_in, w_hh, b_hh, h0, *, alpha):
    """Pure-JAX reference mirroring the PyTorch forward."""
    oneminusalpha = 1.0 - alpha

    def step(h, x_t):
        pre = x_t @ w_in.T + b_in + h @ w_hh.T + b_hh
        h_new = jnp.maximum(h * oneminusalpha + pre * alpha, 0.0)
        return h_new, h_new

    h_last, out = lax.scan(step, h0, x)
    return out, h_last


def make_params(key, input_size, hidden_size, ei_ratio):
    """Deterministic re-implementation of EI_CTRNN.__init__ parameter setup."""
    k1, k2, k3, k4, k5 = jax.random.split(key, 5)
    # nn.Linear default init: U(-1/sqrt(fan_in), 1/sqrt(fan_in))
    bound_in = 1.0 / jnp.sqrt(input_size)
    bound_hh = 1.0 / jnp.sqrt(hidden_size)
    w_in = jax.random.uniform(k1, (hidden_size, input_size), jnp.float32,
                              -bound_in, bound_in)
    b_in = jax.random.uniform(k2, (hidden_size,), jnp.float32,
                              -bound_in, bound_in)
    w_hh = jax.random.uniform(k3, (hidden_size, hidden_size), jnp.float32,
                              -bound_hh, bound_hh)
    b_hh = jax.random.uniform(k4, (hidden_size,), jnp.float32,
                              -bound_hh, bound_hh)
    # mask is None -> no masking applied.
    # hidden_sgns = 2*bernoulli(ei_ratio) - 1, applied as (abs(W).T * sgns).T
    sgns = 2.0 * jax.random.bernoulli(
        k5, p=ei_ratio, shape=(hidden_size,)).astype(jnp.float32) - 1.0
    w_hh = jnp.abs(w_hh) * sgns[:, None]
    return w_in, b_in, w_hh, b_hh


if __name__ == "__main__":
    seq_len, batch, input_size, hidden_size = 8, 2, 4, 32
    ei_ratio = 0.8
    dt, tau = 20.0, 100.0
    alpha = dt / tau

    key = jax.random.PRNGKey(0)
    pkey, xkey, x2key = jax.random.split(key, 3)
    w_in, b_in, w_hh, b_hh = make_params(pkey, input_size, hidden_size, ei_ratio)

    x = jax.random.normal(xkey, (seq_len, batch, input_size), jnp.float32)
    h0 = jnp.zeros((batch, hidden_size), jnp.float32)  # init_hidden

    out_r, h_last_r = ei_ctrnn_reference(x, w_in, b_in, w_hh, b_hh, h0,
                                         alpha=alpha)

    # 1) Exact f32 path; t_blk=3 exercises time padding (8 -> 9) and the
    #    cross-time-block hidden-state carry.
    out, h_last = ei_ctrnn_forward(x, w_in, b_in, w_hh, b_hh, h0, alpha=alpha,
                                   t_blk=3, compute_dtype=jnp.float32)
    out, h_last = jax.block_until_ready((out, h_last))
    assert out.shape == (seq_len, batch, hidden_size)
    assert h_last.shape == (batch, hidden_size)
    assert jnp.allclose(out, out_r, atol=1e-5, rtol=1e-5)
    assert jnp.allclose(h_last, h_last_r, atol=1e-5, rtol=1e-5)
    assert jnp.allclose(out[-1], h_last, atol=1e-6)

    # 2) Default fast path (bf16 matmul operands, t_blk=16); looser tolerance
    #    is the expected bf16 precision change, not a bug.
    out_bf, h_last_bf = ei_ctrnn_forward(x, w_in, b_in, w_hh, b_hh, h0,
                                         alpha=alpha)
    out_bf, h_last_bf = jax.block_until_ready((out_bf, h_last_bf))
    assert jnp.allclose(out_bf, out_r, atol=2e-2, rtol=2e-2)
    assert jnp.allclose(h_last_bf, h_last_r, atol=2e-2, rtol=2e-2)

    # 3) Batch-tiled path: 2 tiles on the leading "parallel" grid axis
    #    (exercises the per-tile h0 fetch and hidden-state reset).
    seq2, batch2 = 6, 10
    x2 = jax.random.normal(x2key, (seq2, batch2, input_size), jnp.float32)
    h02 = jnp.zeros((batch2, hidden_size), jnp.float32)
    out2_r, hl2_r = ei_ctrnn_reference(x2, w_in, b_in, w_hh, b_hh, h02,
                                       alpha=alpha)
    out2, hl2 = ei_ctrnn_forward(x2, w_in, b_in, w_hh, b_hh, h02, alpha=alpha,
                                 t_blk=4, batch_tile=8,
                                 compute_dtype=jnp.float32)
    out2, hl2 = jax.block_until_ready((out2, hl2))
    assert out2.shape == (seq2, batch2, hidden_size)
    assert jnp.allclose(out2, out2_r, atol=1e-5, rtol=1e-5)
    assert jnp.allclose(hl2, hl2_r, atol=1e-5, rtol=1e-5)

    print("KERNEL_OK")
</pallas_src>

<mosaic_0001>
module attributes {stable_mosaic.version = 11 : i64} {
  func.func @_ctrnn_kernel(%arg0: i32, %arg1: i32, %arg2: memref<3x8x4xf32, #tpu.memory_space<vmem>>, %arg3: memref<4x128xf32, #tpu.memory_space<vmem>>, %arg4: memref<1x128xf32, #tpu.memory_space<vmem>>, %arg5: memref<128x128xf32, #tpu.memory_space<vmem>>, %arg6: memref<8x128xf32, #tpu.memory_space<vmem>>, %arg7: memref<3x8x128xf32, #tpu.memory_space<vmem>>, %arg8: memref<8x128xf32, #tpu.memory_space<vmem>>, %arg9: memref<3x8x128xf32, #tpu.memory_space<vmem>>) attributes {dimension_semantics = [#tpu.dimension_semantics<parallel>, #tpu.dimension_semantics<arbitrary>], iteration_bounds = array<i64: 1, 3>, scalar_prefetch = 0 : i64, scratch_operands = 2 : i64, tpu.core_type = #tpu.core_type<tc>, window_params = [{transform_indices = @transform_0, window_bounds = array<i64: 3, 8, 4>}, {pipeline_mode = #tpu.pipeline_mode<synchronous>, transform_indices = @transform_1, window_bounds = array<i64: 4, 128>}, {pipeline_mode = #tpu.pipeline_mode<synchronous>, transform_indices = @transform_2, window_bounds = array<i64: 1, 128>}, {pipeline_mode = #tpu.pipeline_mode<synchronous>, transform_indices = @transform_3, window_bounds = array<i64: 128, 128>}, {transform_indices = @transform_4, window_bounds = array<i64: 8, 128>}, {transform_indices = @transform_5, window_bounds = array<i64: 3, 8, 128>}]} {
    %c0_i32 = arith.constant 0 : i32
    %0 = arith.cmpi eq, %arg1, %c0_i32 : i32
    %1 = arith.extui %0 : i1 to i32
    %c0_i32_0 = arith.constant 0 : i32
    %2 = arith.cmpi ne, %1, %c0_i32_0 : i32
    scf.if %2 {
      %c0_38 = arith.constant 0 : index
      %c0_39 = arith.constant 0 : index
      %57 = vector.load %arg6[%c0_38, %c0_39] : memref<8x128xf32, #tpu.memory_space<vmem>>, vector<8x128xf32>
      %c0_40 = arith.constant 0 : index
      %c0_41 = arith.constant 0 : index
      %58 = vector.load %arg8[%c0_40, %c0_41] : memref<8x128xf32, #tpu.memory_space<vmem>>, vector<8x128xf32>
      tpu.vector_store %arg8[%c0_40, %c0_41], %57 {strides = array<i32>} : memref<8x128xf32, #tpu.memory_space<vmem>>, vector<8x128xf32>,
    } else {
    }
    %c0 = arith.constant 0 : index
    %c0_1 = arith.constant 0 : index
    %c0_2 = arith.constant 0 : index
    %3 = vector.load %arg2[%c0, %c0_1, %c0_2] : memref<3x8x4xf32, #tpu.memory_space<vmem>>, vector<3x8x4xf32>
    %4 = vector.shape_cast %3 : vector<3x8x4xf32> to vector<24x4xf32>
    %c0_3 = arith.constant 0 : index
    %c0_4 = arith.constant 0 : index
    %5 = vector.load %arg3[%c0_3, %c0_4] : memref<4x128xf32, #tpu.memory_space<vmem>>, vector<4x128xf32>
    %cst = arith.constant dense<0.000000e+00> : vector<24x128xf32>
    %6 = tpu.matmul %4, %5, %cst {dimension_numbers = #tpu.dot_dimension_numbers<[1], [0], [0], [1], [0, 0, 1, 1], [], []>} : vector<24x4xf32>, vector<4x128xf32>, vector<24x128xf32> -> vector<24x128xf32>
    %c0_5 = arith.constant 0 : index
    %c0_6 = arith.constant 0 : index
    %7 = vector.load %arg4[%c0_5, %c0_6] : memref<1x128xf32, #tpu.memory_space<vmem>>, vector<1x128xf32>
    %8 = vector.broadcast %7 : vector<1x128xf32> to vector<24x128xf32>
    %9 = arith.addf %6, %8 : vector<24x128xf32>
    %10 = vector.shape_cast %9 : vector<24x128xf32> to vector<3x8x128xf32>
    %c0_7 = arith.constant 0 : index
    %c0_8 = arith.constant 0 : index
    %c0_9 = arith.constant 0 : index
    %11 = vector.load %arg9[%c0_7, %c0_8, %c0_9] : memref<3x8x128xf32, #tpu.memory_space<vmem>>, vector<3x8x128xf32>
    tpu.vector_store %arg9[%c0_7, %c0_8, %c0_9], %10 {strides = array<i32>} : memref<3x8x128xf32, #tpu.memory_space<vmem>>, vector<3x8x128xf32>,
    %c0_10 = arith.constant 0 : index
    %c0_11 = arith.constant 0 : index
    %12 = vector.load %arg5[%c0_10, %c0_11] : memref<128x128xf32, #tpu.memory_space<vmem>>, vector<128x128xf32>
    %c0_12 = arith.constant 0 : index
    %c0_13 = arith.constant 0 : index
    %13 = vector.load %arg8[%c0_12, %c0_13] : memref<8x128xf32, #tpu.memory_space<vmem>>, vector<8x128xf32>
    %c0_i32_14 = arith.constant 0 : i32
    %cst_15 = arith.constant dense<0.000000e+00> : vector<8x128xf32>
    %14 = tpu.matmul %13, %12, %cst_15 {dimension_numbers = #tpu.dot_dimension_numbers<[1], [0], [0], [1], [0, 0, 1, 1], [], []>} : vector<8x128xf32>, vector<128x128xf32>, vector<8x128xf32> -> vector<8x128xf32>
    %cst_16 = arith.constant 8.000000e-01 : f32
    %15 = vector.broadcast %cst_16 : f32 to vector<8x128xf32>
    %16 = arith.mulf %13, %15 : vector<8x128xf32>
    %17 = arith.addf %16, %14 : vector<8x128xf32>
    %18 = arith.index_cast %c0_i32_14 : i32 to index
    %c0_17 = arith.constant 0 : index
    %c0_18 = arith.constant 0 : index
    %19 = vector.load %arg9[%18, %c0_17, %c0_18] : memref<3x8x128xf32, #tpu.memory_space<vmem>>, vector<1x8x128xf32>
    %20 = vector.shape_cast %19 : vector<1x8x128xf32> to vector<8x128xf32>
    %21 = arith.addf %17, %20 : vector<8x128xf32>
    %cst_19 = arith.constant 0.000000e+00 : f32
    %22 = vector.broadcast %cst_19 : f32 to vector<8x128xf32>
    %23 = arith.maximumf %21, %22 : vector<8x128xf32>
    %24 = arith.index_cast %c0_i32_14 : i32 to index
    %c0_20 = arith.constant 0 : index
    %c0_21 = arith.constant 0 : index
    %25 = vector.load %arg7[%24, %c0_20, %c0_21] : memref<3x8x128xf32, #tpu.memory_space<vmem>>, vector<1x8x128xf32>
    %26 = vector.shape_cast %25 : vector<1x8x128xf32> to vector<8x128xf32>
    %27 = vector.shape_cast %23 : vector<8x128xf32> to vector<1x8x128xf32>
    tpu.vector_store %arg7[%24, %c0_20, %c0_21], %27 {strides = array<i32>} : memref<3x8x128xf32, #tpu.memory_space<vmem>>, vector<1x8x128xf32>,
    %c1_i32 = arith.constant 1 : i32
    %cst_22 = arith.constant dense<0.000000e+00> : vector<8x128xf32>
    %28 = tpu.matmul %23, %12, %cst_22 {dimension_numbers = #tpu.dot_dimension_numbers<[1], [0], [0], [1], [0, 0, 1, 1], [], []>} : vector<8x128xf32>, vector<128x128xf32>, vector<8x128xf32> -> vector<8x128xf32>
    %cst_23 = arith.constant 8.000000e-01 : f32
    %29 = vector.broadcast %cst_23 : f32 to vector<8x128xf32>
    %30 = arith.mulf %23, %29 : vector<8x128xf32>
    %31 = arith.addf %30, %28 : vector<8x128xf32>
    %32 = arith.index_cast %c1_i32 : i32 to index
    %c0_24 = arith.constant 0 : index
    %c0_25 = arith.constant 0 : index
    %33 = vector.load %arg9[%32, %c0_24, %c0_25] : memref<3x8x128xf32, #tpu.memory_space<vmem>>, vector<1x8x128xf32>
    %34 = vector.shape_cast %33 : vector<1x8x128xf32> to vector<8x128xf32>
    %35 = arith.addf %31, %34 : vector<8x128xf32>
    %cst_26 = arith.constant 0.000000e+00 : f32
    %36 = vector.broadcast %cst_26 : f32 to vector<8x128xf32>
    %37 = arith.maximumf %35, %36 : vector<8x128xf32>
    %38 = arith.index_cast %c1_i32 : i32 to index
    %c0_27 = arith.constant 0 : index
    %c0_28 = arith.constant 0 : index
    %39 = vector.load %arg7[%38, %c0_27, %c0_28] : memref<3x8x128xf32, #tpu.memory_space<vmem>>, vector<1x8x128xf32>
    %40 = vector.shape_cast %39 : vector<1x8x128xf32> to vector<8x128xf32>
    %41 = vector.shape_cast %37 : vector<8x128xf32> to vector<1x8x128xf32>
    tpu.vector_store %arg7[%38, %c0_27, %c0_28], %41 {strides = array<i32>} : memref<3x8x128xf32, #tpu.memory_space<vmem>>, vector<1x8x128xf32>,
    %c2_i32 = arith.constant 2 : i32
    %cst_29 = arith.constant dense<0.000000e+00> : vector<8x128xf32>
    %42 = tpu.matmul %37, %12, %cst_29 {dimension_numbers = #tpu.dot_dimension_numbers<[1], [0], [0], [1], [0, 0, 1, 1], [], []>} : vector<8x128xf32>, vector<128x128xf32>, vector<8x128xf32> -> vector<8x128xf32>
    %cst_30 = arith.constant 8.000000e-01 : f32
    %43 = vector.broadcast %cst_30 : f32 to vector<8x128xf32>
    %44 = arith.mulf %37, %43 : vector<8x128xf32>
    %45 = arith.addf %44, %42 : vector<8x128xf32>
    %46 = arith.index_cast %c2_i32 : i32 to index
    %c0_31 = arith.constant 0 : index
    %c0_32 = arith.constant 0 : index
    %47 = vector.load %arg9[%46, %c0_31, %c0_32] : memref<3x8x128xf32, #tpu.memory_space<vmem>>, vector<1x8x128xf32>
    %48 = vector.shape_cast %47 : vector<1x8x128xf32> to vector<8x128xf32>
    %49 = arith.addf %45, %48 : vector<8x128xf32>
    %cst_33 = arith.constant 0.000000e+00 : f32
    %50 = vector.broadcast %cst_33 : f32 to vector<8x128xf32>
    %51 = arith.maximumf %49, %50 : vector<8x128xf32>
    %52 = arith.index_cast %c2_i32 : i32 to index
    %c0_34 = arith.constant 0 : index
    %c0_35 = arith.constant 0 : index
    %53 = vector.load %arg7[%52, %c0_34, %c0_35] : memref<3x8x128xf32, #tpu.memory_space<vmem>>, vector<1x8x128xf32>
    %54 = vector.shape_cast %53 : vector<1x8x128xf32> to vector<8x128xf32>
    %55 = vector.shape_cast %51 : vector<8x128xf32> to vector<1x8x128xf32>
    tpu.vector_store %arg7[%52, %c0_34, %c0_35], %55 {strides = array<i32>} : memref<3x8x128xf32, #tpu.memory_space<vmem>>, vector<1x8x128xf32>,
    %c3_i32 = arith.constant 3 : i32
    %c0_36 = arith.constant 0 : index
    %c0_37 = arith.constant 0 : index
    %56 = vector.load %arg8[%c0_36, %c0_37] : memref<8x128xf32, #tpu.memory_space<vmem>>, vector<8x128xf32>
    tpu.vector_store %arg8[%c0_36, %c0_37], %51 {strides = array<i32>} : memref<8x128xf32, #tpu.memory_space<vmem>>, vector<8x128xf32>,
    return
  }
  func.func @transform_0(%arg0: i32, %arg1: i32) -> (i32, i32, i32) {
    %c0_i32 = arith.constant 0 : i32
    %c0_i32_0 = arith.constant 0 : i32
    return %arg1, %arg0, %c0_i32 : i32, i32, i32
  }
  func.func @transform_1(%arg0: i32, %arg1: i32) -> (i32, i32) {
    %c0_i32 = arith.constant 0 : i32
    %c0_i32_0 = arith.constant 0 : i32
    %c0_i32_1 = arith.constant 0 : i32
    return %c0_i32, %c0_i32_0 : i32, i32
  }
  func.func @transform_2(%arg0: i32, %arg1: i32) -> (i32, i32) {
    %c0_i32 = arith.constant 0 : i32
    %c0_i32_0 = arith.constant 0 : i32
    %c0_i32_1 = arith.constant 0 : i32
    return %c0_i32, %c0_i32_0 : i32, i32
  }
  func.func @transform_3(%arg0: i32, %arg1: i32) -> (i32, i32) {
    %c0_i32 = arith.constant 0 : i32
    %c0_i32_0 = arith.constant 0 : i32
    %c0_i32_1 = arith.constant 0 : i32
    return %c0_i32, %c0_i32_0 : i32, i32
  }
  func.func @transform_4(%arg0: i32, %arg1: i32) -> (i32, i32) {
    %c0_i32 = arith.constant 0 : i32
    %c0_i32_0 = arith.constant 0 : i32
    return %arg0, %c0_i32 : i32, i32
  }
  func.func @transform_5(%arg0: i32, %arg1: i32) -> (i32, i32, i32) {
    %c0_i32 = arith.constant 0 : i32
    %c0_i32_0 = arith.constant 0 : i32
    return %arg1, %arg0, %c0_i32 : i32, i32, i32
  }
}

</mosaic_0001>

<llo_original>
// kernel: tpu_custom_call.1
$region0: #{tpu_custom_call.1}
  #allocation0 [shape = 'u32[]', space=smem, size = 0x4, offset = 0x4, fixed_abs, tag = 'smem constant byte address 0x4 - core index']
  #allocation1 [shape = 'u32[144,128]{1,0:T(1,128)}', space=vmem, size = 0x12000, scoped, tag = 'internal scratch']
  #allocation2 [shape = 'f32[8,128]{1,0:T(8,128)}', space=vmem, size = 0x1000, scoped, tag = 'scratch operand']
  #allocation3 [shape = 'f32[3,8,128]{2,1,0:T(8,128)}', space=vmem, size = 0x3000, scoped, tag = 'scratch operand']
  %s0 = inlined_call_operand.vmem [shape: f32[9,8,4], index: 0, kind: input, shape index: {}]
  %s1 = inlined_call_operand.vmem [shape: f32[4,128], index: 1, kind: input, shape index: {}]
  %s2 = inlined_call_operand.vmem [shape: f32[1,128], index: 2, kind: input, shape index: {}]
  %s3 = inlined_call_operand.hbm [shape: f32[128,128], index: 3, kind: input, shape index: {}]
  %s4 = inlined_call_operand.vmem [shape: f32[8,128], index: 4, kind: input, shape index: {}]
  %s5 = inlined_call_operand.hbm [shape: f32[9,8,128], index: 5, kind: output, shape index: {}]
  %s6 = sld [smem:[#allocation0]]
  $region61: #{tpu_custom_call.1} parent=0
    _
  %s8 = ssub.s32 1, %s6
  %s9 = scalar_select 0, %s8, %s6
  $region1: #{tpu_custom_call.1} parent=0
    #allocation4 [shape = 'u8[65536]{0}', space=vmem, size = 0x10000, scoped, tag = 'input window, operand 3, single buffered']
    #allocation5 [shape = 's32[2]{0}', space=sflag, size = 0x8, scoped, tag = 'scoped memory for tpu_custom_call.1']
    #allocation6 [shape = 's32[2]{0}', space=sflag, size = 0x8, scoped, tag = 'scoped memory for tpu_custom_call.1']
    #allocation7 [shape = 'u8[24576]{0}', space=vmem, size = 0x6000, scoped, tag = 'output window, operand 0']
    %10 = vsyncpa [#allocation5], 0
    %11 = vsyncpa [#allocation6], 0
    %s12 = scalar_lea.sflag [#allocation6], 1
    %13 = vsyncpa %s12, 0
    loop: start=0, step=1, limit=5
    $region2: #{tpu_custom_call.1} parent=1 // loop_pre_header
      _
    $region3: #{tpu_custom_call.1} parent=1 // loop_header
      %s15 = sphi 0, %s19
      %p16 = scmp.ge.s32.totalorder %s15, 5
      %s22 = sphi 0, %s34
      %s23 = sphi 0, %s30
      %s24 = sphi 0, %s22
      %s25 = sphi 0, %s23
      %s26 = sphi 0, %s24
      %s27 = sphi 0, %s25
      %s39 = sphi 0, %s41
      %s42 = sphi 0, %s39
      %s43 = sphi 0, %s42
      %s59 = sphi 0, %s43
      %s63 = sphi 0, %s63
      %s65 = sphi 0, %s63
      %s66 = sphi 0, %s65
      %s80 = sphi 0, %s66
      %s84 = sphi 0, %s84
      %s86 = sphi 0, %s84
      %s87 = sphi 0, %s86
      %s101 = sphi 0, %s87
      %s105 = sphi 0, %s105
      %s107 = sphi 0, %s105
      %s108 = sphi 0, %s107
      %s122 = sphi 0, %s108
      %s128 = sphi 0, %s130
      %s131 = sphi 0, %s128
      %s132 = sphi 0, %s131
      %s148 = sphi 0, %s132
      %s156 = sphi 0, %s158
      %s159 = sphi 0, %s156
      %s160 = sphi 0, %s159
      %s176 = sphi 0, %s160
    $region4: #{tpu_custom_call.1} parent=1 // loop_header_branch
      %18 = sbr.rel (%p16) target = $region8
    $region5: #{tpu_custom_call.1} parent=1 // loop_body
      %s20 = ssub.s32 %s15, 1
      %s21 = ssub.s32 %s15, 2
      %s28 = sadd.s32 1, %s23
      %p29 = scmp.ge.s32.totalorder %s28, 3
      %s30 = scalar_select %p29, 0, %s28
      %s31 = sadd.s32 1, %s22
      %s32 = scalar_select %p29, %s31, %s22
      %p33 = scmp.ge.s32.totalorder %s32, 1
      %s34 = scalar_select %p33, 0, %s32
      %s35 = ssub.s32 %s23, %s30
      %s36 = ssub.s32 %s22, %s34
      %s37 = sor.u32 %s35, %s36
      %p38 = scmp.eq.s32.totalorder %s37, 0
      %s40 = sadd.s32 %s39, 1
      %s41 = scalar_select %p38, %s39, %s40
      %p44 = pneg %p38
      %p45 = scmp.eq.s32.totalorder %s15, 2
      %p46 = por %p44, %p45
      %p47 = scmp.ne.s32.totalorder %s39, %s42
      %p48 = scmp.eq.s32.totalorder %s15, 0
      %p49 = por %p47, %p48
      %p50 = scmp.ne.s32.totalorder %s39, %s42
      %p51 = scmp.eq.s32.totalorder %s20, 2
      %p52 = por %p50, %p51
      %p53 = scmp.ne.s32.totalorder %s42, %s43
      %p54 = scmp.eq.s32.totalorder %s20, 0
      %p55 = por %p53, %p54
      %p56 = scmp.ne.s32.totalorder %s42, %s43
      %p57 = scmp.eq.s32.totalorder %s21, 2
      %p58 = por %p56, %p57
      %p60 = scmp.ne.s32.totalorder %s43, %s59
      %p61 = scmp.eq.s32.totalorder %s21, 0
      %p62 = por %p60, %p61
      %s64 = sadd.s32 %s63, 1
      %p67 = scmp.eq.s32.totalorder %s15, 2
      %p68 = scmp.ne.s32.totalorder %s63, %s65
      %p69 = scmp.eq.s32.totalorder %s15, 0
      %p70 = por %p68, %p69
      %p71 = scmp.ne.s32.totalorder %s63, %s65
      %p72 = scmp.eq.s32.totalorder %s20, 2
      %p73 = por %p71, %p72
      %p74 = scmp.ne.s32.totalorder %s65, %s66
      %p75 = scmp.eq.s32.totalorder %s20, 0
      %p76 = por %p74, %p75
      %p77 = scmp.ne.s32.totalorder %s65, %s66
      %p78 = scmp.eq.s32.totalorder %s21, 2
      %p79 = por %p77, %p78
      %p81 = scmp.ne.s32.totalorder %s66, %s80
      %p82 = scmp.eq.s32.totalorder %s21, 0
      %p83 = por %p81, %p82
      %s85 = sadd.s32 %s84, 1
      %p88 = scmp.eq.s32.totalorder %s15, 2
      %p89 = scmp.ne.s32.totalorder %s84, %s86
      %p90 = scmp.eq.s32.totalorder %s15, 0
      %p91 = por %p89, %p90
      %p92 = scmp.ne.s32.totalorder %s84, %s86
      %p93 = scmp.eq.s32.totalorder %s20, 2
      %p94 = por %p92, %p93
      %p95 = scmp.ne.s32.totalorder %s86, %s87
      %p96 = scmp.eq.s32.totalorder %s20, 0
      %p97 = por %p95, %p96
      %p98 = scmp.ne.s32.totalorder %s86, %s87
      %p99 = scmp.eq.s32.totalorder %s21, 2
      %p100 = por %p98, %p99
      %p102 = scmp.ne.s32.totalorder %s87, %s101
      %p103 = scmp.eq.s32.totalorder %s21, 0
      %p104 = por %p102, %p103
      %s106 = sadd.s32 %s105, 1
      %p109 = scmp.eq.s32.totalorder %s15, 2
      %p110 = scmp.ne.s32.totalorder %s105, %s107
      %p111 = scmp.eq.s32.totalorder %s15, 0
      %p112 = por %p110, %p111
      %p113 = scmp.ne.s32.totalorder %s105, %s107
      %p114 = scmp.eq.s32.totalorder %s20, 2
      %p115 = por %p113, %p114
      %p116 = scmp.ne.s32.totalorder %s107, %s108
      %p117 = scmp.eq.s32.totalorder %s20, 0
      %p118 = por %p116, %p117
      %p119 = scmp.ne.s32.totalorder %s107, %s108
      %p120 = scmp.eq.s32.totalorder %s21, 2
      %p121 = por %p119, %p120
      %p123 = scmp.ne.s32.totalorder %s108, %s122
      %p124 = scmp.eq.s32.totalorder %s21, 0
      %p125 = por %p123, %p124
      %s126 = ssub.s32 %s22, %s34
      %p127 = scmp.eq.s32.totalorder %s126, 0
      %s129 = sadd.s32 %s128, 1
      %s130 = scalar_select %p127, %s128, %s129
      %p133 = pneg %p127
      %p134 = scmp.eq.s32.totalorder %s15, 2
      %p135 = por %p133, %p134
      %p136 = scmp.ne.s32.totalorder %s128, %s131
      %p137 = scmp.eq.s32.totalorder %s15, 0
      %p138 = por %p136, %p137
      %p139 = scmp.ne.s32.totalorder %s128, %s131
      %p140 = scmp.eq.s32.totalorder %s20, 2
      %p141 = por %p139, %p140
      %p142 = scmp.ne.s32.totalorder %s131, %s132
      %p143 = scmp.eq.s32.totalorder %s20, 0
      %p144 = por %p142, %p143
      %p145 = scmp.ne.s32.totalorder %s131, %s132
      %p146 = scmp.eq.s32.totalorder %s21, 2
      %p147 = por %p145, %p146
      %p149 = scmp.ne.s32.totalorder %s132, %s148
      %p150 = scmp.eq.s32.totalorder %s21, 0
      %p151 = por %p149, %p150
      %s152 = ssub.s32 %s23, %s30
      %s153 = ssub.s32 %s22, %s34
      %s154 = sor.u32 %s152, %s153
      %p155 = scmp.eq.s32.totalorder %s154, 0
      %s157 = sadd.s32 %s156, 1
      %s158 = scalar_select %p155, %s156, %s157
      %p161 = pneg %p155
      %p162 = scmp.eq.s32.totalorder %s15, 2
      %p163 = por %p161, %p162
      %p164 = scmp.ne.s32.totalorder %s156, %s159
      %p165 = scmp.eq.s32.totalorder %s15, 0
      %p166 = por %p164, %p165
      %p167 = scmp.ne.s32.totalorder %s156, %s159
      %p168 = scmp.eq.s32.totalorder %s20, 2
      %p169 = por %p167, %p168
      %p170 = scmp.ne.s32.totalorder %s159, %s160
      %p171 = scmp.eq.s32.totalorder %s20, 0
      %p172 = por %p170, %p171
      %p173 = scmp.ne.s32.totalorder %s159, %s160
      %p174 = scmp.eq.s32.totalorder %s21, 2
      %p175 = por %p173, %p174
      %p177 = scmp.ne.s32.totalorder %s160, %s176
      %p178 = scmp.eq.s32.totalorder %s21, 0
      %p179 = por %p177, %p178
      %p180 = scmp.le.s32.totalorder 1, %s15
      %p181 = scmp.lt.s32.totalorder %s15, 4
      %p182 = pnand %p180, %p181
      %p183 = pneg %p182
      // Predicated region
      $region9: #{tpu_custom_call.1} parent=5 // pred_check
        _
      $region10: #{tpu_custom_call.1} parent=5 // pred_check_branch
        %185 = sbr.rel (%p182) target = $region12
      $region11: #{tpu_custom_call.1} parent=5 // pred_region
        %s186 = ssub.s32 %s15, 1
        // Predicated region
        $region13: #{tpu_custom_call.1} parent=11 // pred_check
          %p187 = pneg %p76
        $region14: #{tpu_custom_call.1} parent=11 // pred_check_branch
          %189 = sbr.rel (%p187) target = $region16
        $region15: #{tpu_custom_call.1} parent=11 // pred_region
          _
        $region16: #{tpu_custom_call.1} parent=11 // pred_fallthru
          _
        // Predicated region
        $region17: #{tpu_custom_call.1} parent=11 // pred_check
          %p190 = pneg %p97
        $region18: #{tpu_custom_call.1} parent=11 // pred_check_branch
          %192 = sbr.rel (%p190) target = $region20
        $region19: #{tpu_custom_call.1} parent=11 // pred_region
          _
        $region20: #{tpu_custom_call.1} parent=11 // pred_fallthru
          _
        // Predicated region
        $region21: #{tpu_custom_call.1} parent=11 // pred_check
          %p193 = pneg %p118
        $region22: #{tpu_custom_call.1} parent=11 // pred_check_branch
          %195 = sbr.rel (%p193) target = $region24
        $region23: #{tpu_custom_call.1} parent=11 // pred_region
          %s197 = ssub.s32 2048, 2048
          %198 = vsyncadd [#allocation5], %s197
          %s199 = sshll.u32 [#allocation4], 4
          %s200 = int_to_ptr.vmem [resolvable:$true] %s199
          %205 = dma.hbm_to_vmem [thread:$0]  %s3, 2048, %s200, [#allocation5], 128, 128, 8
        $region24: #{tpu_custom_call.1} parent=11 // pred_fallthru
          _
        // Predicated region
        $region25: #{tpu_custom_call.1} parent=11 // pred_check
          %p206 = pneg %p144
        $region26: #{tpu_custom_call.1} parent=11 // pred_check_branch
          %208 = sbr.rel (%p206) target = $region28
        $region27: #{tpu_custom_call.1} parent=11 // pred_region
          %p209 = scmp.lt.s32.totalorder %s24, 0
          %s210 = scalar_select %p209, %s24, 0
          %s211 = smul.addr %s210, 8
          %s212 = scalar_lea.vmem %s4, %s211
        $region28: #{tpu_custom_call.1} parent=11 // pred_fallthru
          _
      $region12: #{tpu_custom_call.1} parent=5 // pred_fallthru
        _
      %p213 = scmp.lt.s32.totalorder %s15, 3
      // Predicated region
      $region29: #{tpu_custom_call.1} parent=5 // pred_check
        %p214 = pneg %p213
      $region30: #{tpu_custom_call.1} parent=5 // pred_check_branch
        %216 = sbr.rel (%p214) target = $region32
      $region31: #{tpu_custom_call.1} parent=5 // pred_region
        // Predicated region
        $region33: #{tpu_custom_call.1} parent=31 // pred_check
          %p217 = pneg %p49
        $region34: #{tpu_custom_call.1} parent=31 // pred_check_branch
          %219 = sbr.rel (%p217) target = $region36
        $region35: #{tpu_custom_call.1} parent=31 // pred_region
          %s220 = smul.u32 3, %s23
          %p221 = scmp.lt.s32.totalorder %s220, 8
          %s222 = scalar_select %p221, %s220, 8
          %p223 = scmp.lt.s32.totalorder %s22, 0
          %s224 = scalar_select %p223, %s22, 0
          %s225 = sadd.s32 %s224, %s222
          %s226 = smul.addr %s225, 8
          %s227 = scalar_lea.vmem %s0, %s226
          %s228 = smul.u32 3, %s23
        $region36: #{tpu_custom_call.1} parent=31 // pred_fallthru
          _
      $region32: #{tpu_custom_call.1} parent=5 // pred_fallthru
        _
      %p229 = scmp.le.s32.totalorder 1, %s15
      %p230 = scmp.lt.s32.totalorder %s15, 4
      %p231 = pnand %p229, %p230
      %p232 = pneg %p231
      // Predicated region
      $region37: #{tpu_custom_call.1} parent=5 // pred_check
        _
      $region38: #{tpu_custom_call.1} parent=5 // pred_check_branch
        %234 = sbr.rel (%p231) target = $region40
      $region39: #{tpu_custom_call.1} parent=5 // pred_region
        %s235 = ssub.s32 %s15, 1
        // Predicated region
        $region41: #{tpu_custom_call.1} parent=39 // pred_check
          %p236 = pneg %p118
        $region42: #{tpu_custom_call.1} parent=39 // pred_check_branch
          %238 = sbr.rel (%p236) target = $region44
        $region43: #{tpu_custom_call.1} parent=39 // pred_region
          %239 = dma.done [#allocation5], 2048
        $region44: #{tpu_custom_call.1} parent=39 // pred_fallthru
          _
        %s240 = smul.u32 3, %s25
        %p241 = scmp.lt.s32.totalorder %s240, 8
        %s242 = scalar_select %p241, %s240, 8
        %p243 = scmp.lt.s32.totalorder %s24, 0
        %s244 = scalar_select %p243, %s24, 0
        %s245 = sadd.s32 %s244, %s242
        %s246 = smul.addr %s245, 8
        %s247 = scalar_lea.vmem %s0, %s246
        %p248 = pneg %p55
        %p249 = pneg %p52
        %p250 = pneg %p76
        %p251 = pneg %p73
        %p252 = pneg %p97
        %p253 = pneg %p94
        %p254 = pneg %p118
        %p255 = pneg %p115
        %p256 = scmp.lt.s32.totalorder %s24, 0
        %s257 = scalar_select %p256, %s24, 0
        %s258 = smul.addr %s257, 8
        %s259 = scalar_lea.vmem %s4, %s258
        %p260 = pneg %p144
        %p261 = pneg %p141
        %p262 = pneg %p172
        %p263 = pneg %p169
        %s264 = sand.u32 %s159, 1
        %s265 = scalar_lea.sflag [#allocation6], %s264
        %s266 = sand.u32 %s159, 1
        %s267 = smul.addr %s266, 24
        %s268 = scalar_lea.vmem [#allocation7], %s267
        %s269 = smul.u32 3, %s25
        %p270 = scmp.lt.s32.totalorder %s269, 8
        %s271 = scalar_select %p270, %s269, 8
        %p272 = scmp.lt.s32.totalorder %s24, 0
        %s273 = scalar_select %p272, %s24, 0
        %s274 = sadd.s32 %s273, %s271
        %s275 = smul.addr %s274, 8
        %s276 = scalar_lea.vmem %s0, %s275
        %s277 = smul.u32 3, %s25
        %p278 = scmp.lt.s32.totalorder %s24, 0
        %s279 = scalar_select %p278, %s24, 0
        %s280 = smul.addr %s279, 8
        %s281 = scalar_lea.vmem %s4, %s280
        %s282 = smul.u32 3, %s25
        %p283 = scmp.eq.s32.totalorder %s25, 0
        // Predicated region
        $region45: #{tpu_custom_call.1} parent=39 // pred_check
          %p284 = pneg %p283
        $region46: #{tpu_custom_call.1} parent=39 // pred_check_branch
          %286 = sbr.rel (%p284) target = $region48
        $region47: #{tpu_custom_call.1} parent=39 // pred_region
          %v287 = vld [vmem:[%s281] sm:$0xff]
          %288 = vst [vmem:[#allocation2] sm:$0xff] %v287
        $region48: #{tpu_custom_call.1} parent=39 // pred_fallthru
          _
        %v289 = vld [vmem:[%s276] sm:$0xff]
        %v290 = vld [vmem:[%s276 + $0x8] sm:$0xff]
        %v291 = vld [vmem:[%s276 + $0x10] sm:$0xff]
        %v292 = vld [vmem:[%s1] sm:$0xf]
        %v293 = vld [vmem:[%s2] sm:$0x1]
        %v295 = vlaneseq
        %v296 = vshrl.u32 %v295, 7
        %v297 = vsub.s32 0, %v296
        %v298 = vrot.slane %v293, %v297
        %vm300 = vcmask 31744
        %v302 = vsel %vm300, %v289, 0
        %v305 = vsel %vm300, %v290, 0
        %v308 = vsel %vm300, %v291, 0
        %vm310 = vcmask 1043456
        %v312 = vsel %vm310, %v292, 0
        %314 = vmatprep.subr.mxu0 0.0
        %315 = vmatpush1.msra.mxu0 %v312
        %316 = vmatprep.subr.mxu0 0.0
        %317 = vmatpush1.msra.mxu0 0.0
        %318 = vmatprep.subr.mxu0 0.0
        %319 = vmatpush1.msra.mxu0 0.0
        %320 = vmatprep.subr.mxu0 0.0
        %321 = vmatpush1.msra.mxu0 0.0
        %322 = vmatprep.subr.mxu0 0.0
        %323 = vmatpush1.msra.mxu0 0.0
        %324 = vmatprep.subr.mxu0 0.0
        %325 = vmatpush1.msra.mxu0 0.0
        %326 = vmatprep.subr.mxu0 0.0
        %327 = vmatpush1.msra.mxu0 0.0
        %328 = vmatprep.subr.mxu0 0.0
        %329 = vmatpush1.msra.mxu0 0.0
        %330 = vmatprep.subr.mxu0 0.0
        %331 = vmatpush1.msra.mxu0 0.0
        %332 = vmatprep.subr.mxu0 0.0
        %333 = vmatpush1.msra.mxu0 0.0
        %334 = vmatprep.subr.mxu0 0.0
        %335 = vmatpush1.msra.mxu0 0.0
        %336 = vmatprep.subr.mxu0 0.0
        %337 = vmatpush1.msra.mxu0 0.0
        %338 = vmatprep.subr.mxu0 0.0
        %339 = vmatpush1.msra.mxu0 0.0
        %340 = vmatprep.subr.mxu0 0.0
        %341 = vmatpush1.msra.mxu0 0.0
        %342 = vmatprep.subr.mxu0 0.0
        %343 = vmatpush1.msra.mxu0 0.0
        %344 = vmatprep.subr.mxu0 0.0
        %345 = vmatpush1.msra.mxu0 0.0
        %346 = vmatprep.subr.mxu0 0.0
        %347 = vmatpush1.msra.mxu0 0.0
        %348 = vmatprep.subr.mxu0 0.0
        %349 = vmatpush1.msra.mxu0 0.0
        %350 = vmatprep.subr.mxu0 0.0
        %351 = vmatpush1.msra.mxu0 0.0
        %352 = vmatprep.subr.mxu0 0.0
        %353 = vmatpush1.msra.mxu0 0.0
        %354 = vmatprep.subr.mxu0 0.0
        %355 = vmatpush1.msra.mxu0 0.0
        %356 = vmatprep.subr.mxu0 0.0
        %357 = vmatpush1.msra.mxu0 0.0
        %358 = vmatprep.subr.mxu0 0.0
        %359 = vmatpush1.msra.mxu0 0.0
        %360 = vmatprep.subr.mxu0 0.0
        %361 = vmatpush1.msra.mxu0 0.0
        %362 = vmatprep.subr.mxu0 0.0
        %363 = vmatpush1.msra.mxu0 0.0
        %364 = vmatprep.subr.mxu0 0.0
        %365 = vmatpush1.msra.mxu0 0.0
        %366 = vmatprep.subr.mxu0 0.0
        %367 = vmatpush1.msra.mxu0 0.0
        %368 = vmatprep.subr.mxu0 0.0
        %369 = vmatpush1.msra.mxu0 0.0
        %370 = vmatprep.subr.mxu0 0.0
        %371 = vmatpush1.msra.mxu0 0.0
        %372 = vmatprep.subr.mxu0 0.0
        %373 = vmatpush1.msra.mxu0 0.0
        %374 = vmatprep.subr.mxu0 0.0
        %375 = vmatpush1.msra.mxu0 0.0
        %376 = vmatprep.subr.mxu0 0.0
        %377 = vmatpush1.msra.mxu0 0.0
        %378 = vmatprep.mubr.f32.mxu0 0.0
        %379 = vmatmul.mubr.f32.gmra.mrb[0].mxu0 %v302
        %v380 = vpop.f32.mrb[0].mxu0
        %v381 = vadd.f32 %v298, %v380
        %v382 = vpop.f32.mrb[0].mxu0
        %383 = vmatprep.mubr.f32.mxu0 0.0
        %384 = vmatmul.mubr.f32.gmra.mrb[0].mxu0 %v305
        %v385 = vpop.f32.mrb[0].mxu0
        %v386 = vadd.f32 %v298, %v385
        %v387 = vpop.f32.mrb[0].mxu0
        %388 = vmatprep.mubr.f32.mxu0 0.0
        %389 = vmatmul.mubr.f32.gmra.mrb[0].mxu0 %v308
        %v390 = vpop.f32.mrb[0].mxu0
        %v391 = vadd.f32 %v298, %v390
        %v392 = vpop.f32.mrb[0].mxu0
        %393 = vdwg.mxu0
        %394 = vst [vmem:[#allocation3] sm:$0xff] %v381
        %395 = vst [vmem:[#allocation3 + $0x8] sm:$0xff] %v386
        %396 = vst [vmem:[#allocation3 + $0x10] sm:$0xff] %v391
        %v397 = vld [vmem:[#allocation4] sm:$0xff]
        %v398 = vld [vmem:[#allocation4 + $0x8] sm:$0xff]
        %v399 = vld [vmem:[#allocation4 + $0x10] sm:$0xff]
        %v400 = vld [vmem:[#allocation4 + $0x18] sm:$0xff]
        %v401 = vld [vmem:[#allocation4 + $0x20] sm:$0xff]
        %v402 = vld [vmem:[#allocation4 + $0x28] sm:$0xff]
        %v403 = vld [vmem:[#allocation4 + $0x30] sm:$0xff]
        %v404 = vld [vmem:[#allocation4 + $0x38] sm:$0xff]
        %v405 = vld [vmem:[#allocation4 + $0x40] sm:$0xff]
        %v406 = vld [vmem:[#allocation4 + $0x48] sm:$0xff]
        %v407 = vld [vmem:[#allocation4 + $0x50] sm:$0xff]
        %v408 = vld [vmem:[#allocation4 + $0x58] sm:$0xff]
        %v409 = vld [vmem:[#allocation4 + $0x60] sm:$0xff]
        %v410 = vld [vmem:[#allocation4 + $0x68] sm:$0xff]
        %v411 = vld [vmem:[#allocation4 + $0x70] sm:$0xff]
        %v412 = vld [vmem:[#allocation4 + $0x78] sm:$0xff]
        %v413 = vld [vmem:[#allocation2] sm:$0xff]
        %414 = vmatprep.subr.mxu0 0.0
        %415 = vmatpush1.msra.mxu0 %v397
        %416 = vmatprep.subr.mxu0 0.0
        %417 = vmatpush1.msra.mxu0 %v398
        %418 = vmatprep.subr.mxu0 0.0
        %419 = vmatpush1.msra.mxu0 %v399
        %420 = vmatprep.subr.mxu0 0.0
        %421 = vmatpush1.msra.mxu0 %v400
        %422 = vmatprep.subr.mxu0 0.0
        %423 = vmatpush1.msra.mxu0 %v401
        %424 = vmatprep.subr.mxu0 0.0
        %425 = vmatpush1.msra.mxu0 %v402
        %426 = vmatprep.subr.mxu0 0.0
        %427 = vmatpush1.msra.mxu0 %v403
        %428 = vmatprep.subr.mxu0 0.0
        %429 = vmatpush1.msra.mxu0 %v404
        %430 = vmatprep.subr.mxu0 0.0
        %431 = vmatpush1.msra.mxu0 %v405
        %432 = vmatprep.subr.mxu0 0.0
        %433 = vmatpush1.msra.mxu0 %v406
        %434 = vmatprep.subr.mxu0 0.0
        %435 = vmatpush1.msra.mxu0 %v407
        %436 = vmatprep.subr.mxu0 0.0
        %437 = vmatpush1.msra.mxu0 %v408
        %438 = vmatprep.subr.mxu0 0.0
        %439 = vmatpush1.msra.mxu0 %v409
        %440 = vmatprep.subr.mxu0 0.0
        %441 = vmatpush1.msra.mxu0 %v410
        %442 = vmatprep.subr.mxu0 0.0
        %443 = vmatpush1.msra.mxu0 %v411
        %444 = vmatprep.subr.mxu0 0.0
        %445 = vmatpush1.msra.mxu0 %v412
        %446 = vmatprep.subr.mxu0 0.0
        %447 = vmatpush1.msra.mxu0 0.0
        %448 = vmatprep.subr.mxu0 0.0
        %449 = vmatpush1.msra.mxu0 0.0
        %450 = vmatprep.subr.mxu0 0.0
        %451 = vmatpush1.msra.mxu0 0.0
        %452 = vmatprep.subr.mxu0 0.0
        %453 = vmatpush1.msra.mxu0 0.0
        %454 = vmatprep.subr.mxu0 0.0
        %455 = vmatpush1.msra.mxu0 0.0
        %456 = vmatprep.subr.mxu0 0.0
        %457 = vmatpush1.msra.mxu0 0.0
        %458 = vmatprep.subr.mxu0 0.0
        %459 = vmatpush1.msra.mxu0 0.0
        %460 = vmatprep.subr.mxu0 0.0
        %461 = vmatpush1.msra.mxu0 0.0
        %462 = vmatprep.subr.mxu0 0.0
        %463 = vmatpush1.msra.mxu0 0.0
        %464 = vmatprep.subr.mxu0 0.0
        %465 = vmatpush1.msra.mxu0 0.0
        %466 = vmatprep.subr.mxu0 0.0
        %467 = vmatpush1.msra.mxu0 0.0
        %468 = vmatprep.subr.mxu0 0.0
        %469 = vmatpush1.msra.mxu0 0.0
        %470 = vmatprep.subr.mxu0 0.0
        %471 = vmatpush1.msra.mxu0 0.0
        %472 = vmatprep.subr.mxu0 0.0
        %473 = vmatpush1.msra.mxu0 0.0
        %474 = vmatprep.subr.mxu0 0.0
        %475 = vmatpush1.msra.mxu0 0.0
        %476 = vmatprep.subr.mxu0 0.0
        %477 = vmatpush1.msra.mxu0 0.0
        %478 = vmatprep.mubr.f32.mxu0 0.0
        %479 = vmatmul.mubr.f32.gmra.mrb[0].mxu0 %v413
        %v480 = vpop.f32.mrb[0].mxu0
        %v481 = vadd.f32 0.0, %v480
        %v482 = vpop.f32.mrb[0].mxu0
        %483 = vdwg.mxu0
        %v484 = vmul.f32 %v413, 0.8
        %v485 = vadd.f32 %v484, %v481
        %v486 = vld [vmem:[#allocation3] sm:$0xff]
        %v487 = vadd.f32 %v485, %v486
        %v488 = vmax.f32 %v487, 0.0
        %489 = vst [vmem:[%s268] sm:$0xff] %v488
        %490 = vmatprep.subr.mxu0 0.0
        %491 = vmatpush1.msra.mxu0 %v397
        %492 = vmatprep.subr.mxu0 0.0
        %493 = vmatpush1.msra.mxu0 %v398
        %494 = vmatprep.subr.mxu0 0.0
        %495 = vmatpush1.msra.mxu0 %v399
        %496 = vmatprep.subr.mxu0 0.0
        %497 = vmatpush1.msra.mxu0 %v400
        %498 = vmatprep.subr.mxu0 0.0
        %499 = vmatpush1.msra.mxu0 %v401
        %500 = vmatprep.subr.mxu0 0.0
        %501 = vmatpush1.msra.mxu0 %v402
        %502 = vmatprep.subr.mxu0 0.0
        %503 = vmatpush1.msra.mxu0 %v403
        %504 = vmatprep.subr.mxu0 0.0
        %505 = vmatpush1.msra.mxu0 %v404
        %506 = vmatprep.subr.mxu0 0.0
        %507 = vmatpush1.msra.mxu0 %v405
        %508 = vmatprep.subr.mxu0 0.0
        %509 = vmatpush1.msra.mxu0 %v406
        %510 = vmatprep.subr.mxu0 0.0
        %511 = vmatpush1.msra.mxu0 %v407
        %512 = vmatprep.subr.mxu0 0.0
        %513 = vmatpush1.msra.mxu0 %v408
        %514 = vmatprep.subr.mxu0 0.0
        %515 = vmatpush1.msra.mxu0 %v409
        %516 = vmatprep.subr.mxu0 0.0
        %517 = vmatpush1.msra.mxu0 %v410
        %518 = vmatprep.subr.mxu0 0.0
        %519 = vmatpush1.msra.mxu0 %v411
        %520 = vmatprep.subr.mxu0 0.0
        %521 = vmatpush1.msra.mxu0 %v412
        %522 = vmatprep.subr.mxu0 0.0
        %523 = vmatpush1.msra.mxu0 0.0
        %524 = vmatprep.subr.mxu0 0.0
        %525 = vmatpush1.msra.mxu0 0.0
        %526 = vmatprep.subr.mxu0 0.0
        %527 = vmatpush1.msra.mxu0 0.0
        %528 = vmatprep.subr.mxu0 0.0
        %529 = vmatpush1.msra.mxu0 0.0
        %530 = vmatprep.subr.mxu0 0.0
        %531 = vmatpush1.msra.mxu0 0.0
        %532 = vmatprep.subr.mxu0 0.0
        %533 = vmatpush1.msra.mxu0 0.0
        %534 = vmatprep.subr.mxu0 0.0
        %535 = vmatpush1.msra.mxu0 0.0
        %536 = vmatprep.subr.mxu0 0.0
        %537 = vmatpush1.msra.mxu0 0.0
        %538 = vmatprep.subr.mxu0 0.0
        %539 = vmatpush1.msra.mxu0 0.0
        %540 = vmatprep.subr.mxu0 0.0
        %541 = vmatpush1.msra.mxu0 0.0
        %542 = vmatprep.subr.mxu0 0.0
        %543 = vmatpush1.msra.mxu0 0.0
        %544 = vmatprep.subr.mxu0 0.0
        %545 = vmatpush1.msra.mxu0 0.0
        %546 = vmatprep.subr.mxu0 0.0
        %547 = vmatpush1.msra.mxu0 0.0
        %548 = vmatprep.subr.mxu0 0.0
        %549 = vmatpush1.msra.mxu0 0.0
        %550 = vmatprep.subr.mxu0 0.0
        %551 = vmatpush1.msra.mxu0 0.0
        %552 = vmatprep.subr.mxu0 0.0
        %553 = vmatpush1.msra.mxu0 0.0
        %554 = vmatprep.mubr.f32.mxu0 0.0
        %555 = vmatmul.mubr.f32.gmra.mrb[0].mxu0 %v488
        %v556 = vpop.f32.mrb[0].mxu0
        %v557 = vadd.f32 0.0, %v556
        %v558 = vpop.f32.mrb[0].mxu0
        %559 = vdwg.mxu0
        %v560 = vmul.f32 %v488, 0.8
        %v561 = vadd.f32 %v560, %v557
        %s562 = scalar_lea.vmem [#allocation3], 8
        %v563 = vld [vmem:[%s562] sm:$0xff]
        %v564 = vadd.f32 %v561, %v563
        %v565 = vmax.f32 %v564, 0.0
        %s566 = scalar_lea.vmem %s268, 8 [#allocation7]
        %567 = vst [vmem:[%s566] sm:$0xff] %v565
        %568 = vmatprep.subr.mxu0 0.0
        %569 = vmatpush1.msra.mxu0 %v397
        %570 = vmatprep.subr.mxu0 0.0
        %571 = vmatpush1.msra.mxu0 %v398
        %572 = vmatprep.subr.mxu0 0.0
        %573 = vmatpush1.msra.mxu0 %v399
        %574 = vmatprep.subr.mxu0 0.0
        %575 = vmatpush1.msra.mxu0 %v400
        %576 = vmatprep.subr.mxu0 0.0
        %577 = vmatpush1.msra.mxu0 %v401
        %578 = vmatprep.subr.mxu0 0.0
        %579 = vmatpush1.msra.mxu0 %v402
        %580 = vmatprep.subr.mxu0 0.0
        %581 = vmatpush1.msra.mxu0 %v403
        %582 = vmatprep.subr.mxu0 0.0
        %583 = vmatpush1.msra.mxu0 %v404
        %584 = vmatprep.subr.mxu0 0.0
        %585 = vmatpush1.msra.mxu0 %v405
        %586 = vmatprep.subr.mxu0 0.0
        %587 = vmatpush1.msra.mxu0 %v406
        %588 = vmatprep.subr.mxu0 0.0
        %589 = vmatpush1.msra.mxu0 %v407
        %590 = vmatprep.subr.mxu0 0.0
        %591 = vmatpush1.msra.mxu0 %v408
        %592 = vmatprep.subr.mxu0 0.0
        %593 = vmatpush1.msra.mxu0 %v409
        %594 = vmatprep.subr.mxu0 0.0
        %595 = vmatpush1.msra.mxu0 %v410
        %596 = vmatprep.subr.mxu0 0.0
        %597 = vmatpush1.msra.mxu0 %v411
        %598 = vmatprep.subr.mxu0 0.0
        %599 = vmatpush1.msra.mxu0 %v412
        %600 = vmatprep.subr.mxu0 0.0
        %601 = vmatpush1.msra.mxu0 0.0
        %602 = vmatprep.subr.mxu0 0.0
        %603 = vmatpush1.msra.mxu0 0.0
        %604 = vmatprep.subr.mxu0 0.0
        %605 = vmatpush1.msra.mxu0 0.0
        %606 = vmatprep.subr.mxu0 0.0
        %607 = vmatpush1.msra.mxu0 0.0
        %608 = vmatprep.subr.mxu0 0.0
        %609 = vmatpush1.msra.mxu0 0.0
        %610 = vmatprep.subr.mxu0 0.0
        %611 = vmatpush1.msra.mxu0 0.0
        %612 = vmatprep.subr.mxu0 0.0
        %613 = vmatpush1.msra.mxu0 0.0
        %614 = vmatprep.subr.mxu0 0.0
        %615 = vmatpush1.msra.mxu0 0.0
        %616 = vmatprep.subr.mxu0 0.0
        %617 = vmatpush1.msra.mxu0 0.0
        %618 = vmatprep.subr.mxu0 0.0
        %619 = vmatpush1.msra.mxu0 0.0
        %620 = vmatprep.subr.mxu0 0.0
        %621 = vmatpush1.msra.mxu0 0.0
        %622 = vmatprep.subr.mxu0 0.0
        %623 = vmatpush1.msra.mxu0 0.0
        %624 = vmatprep.subr.mxu0 0.0
        %625 = vmatpush1.msra.mxu0 0.0
        %626 = vmatprep.subr.mxu0 0.0
        %627 = vmatpush1.msra.mxu0 0.0
        %628 = vmatprep.subr.mxu0 0.0
        %629 = vmatpush1.msra.mxu0 0.0
        %630 = vmatprep.subr.mxu0 0.0
        %631 = vmatpush1.msra.mxu0 0.0
        %632 = vmatprep.mubr.f32.mxu0 0.0
        %633 = vmatmul.mubr.f32.gmra.mrb[0].mxu0 %v565
        %v634 = vpop.f32.mrb[0].mxu0
        %v635 = vadd.f32 0.0, %v634
        %v636 = vpop.f32.mrb[0].mxu0
        %637 = vdwg.mxu0
        %v638 = vmul.f32 %v565, 0.8
        %v639 = vadd.f32 %v638, %v635
        %s640 = scalar_lea.vmem [#allocation3], 16
        %v641 = vld [vmem:[%s640] sm:$0xff]
        %v642 = vadd.f32 %v639, %v641
        %v643 = vmax.f32 %v642, 0.0
        %s644 = scalar_lea.vmem %s268, 16 [#allocation7]
        %645 = vst [vmem:[%s644] sm:$0xff] %v643
        %646 = vst [vmem:[#allocation2] sm:$0xff] %v643
        %s647 = sand.u32 %s159, 1
        %s648 = scalar_lea.sflag [#allocation6], %s647
        %s649 = sand.u32 %s159, 1
        %s650 = smul.addr %s649, 24
        %s651 = scalar_lea.vmem [#allocation7], %s650
        // Predicated region
        $region49: #{tpu_custom_call.1} parent=39 // pred_check
          %p652 = pneg %p169
        $region50: #{tpu_custom_call.1} parent=39 // pred_check_branch
          %654 = sbr.rel (%p652) target = $region52
        $region51: #{tpu_custom_call.1} parent=39 // pred_region
          %s655 = smul.u32 3, %s25
          %s657 = ssub.s32 384, 384
          %658 = vsyncadd %s648, %s657
          %s659 = sadd.s32 %s24, %s655
          %s660 = smul.addr %s659, 128
          %s661 = scalar_lea.hbm %s5, %s660
          %s662 = sshll.u32 %s651, 4
          %s663 = int_to_ptr.vmem [resolvable:$true] %s662
          %668 = dma.vmem_to_hbm [thread:$0]  %s663, 384, %s661, %s648, 128, 128, 8
        $region52: #{tpu_custom_call.1} parent=39 // pred_fallthru
          _
      $region40: #{tpu_custom_call.1} parent=5 // pred_fallthru
        _
      %p669 = scmp.le.s32.totalorder 2, %s15
      // Predicated region
      $region53: #{tpu_custom_call.1} parent=5 // pred_check
        %p670 = pneg %p669
      $region54: #{tpu_custom_call.1} parent=5 // pred_check_branch
        %672 = sbr.rel (%p670) target = $region56
      $region55: #{tpu_custom_call.1} parent=5 // pred_region
        %s673 = ssub.s32 %s15, 2
        // Predicated region
        $region57: #{tpu_custom_call.1} parent=55 // pred_check
          %p674 = pneg %p175
        $region58: #{tpu_custom_call.1} parent=55 // pred_check_branch
          %676 = sbr.rel (%p674) target = $region60
        $region59: #{tpu_custom_call.1} parent=55 // pred_region
          %s677 = sand.u32 %s160, 1
          %s678 = scalar_lea.sflag [#allocation6], %s677
          %s679 = sand.u32 %s160, 1
          %s680 = smul.addr %s679, 24
          %s681 = scalar_lea.vmem [#allocation7], %s680
          %682 = dma.done %s678, 384
        $region60: #{tpu_custom_call.1} parent=55 // pred_fallthru
          _
      $region56: #{tpu_custom_call.1} parent=5 // pred_fallthru
        _
    $region6: #{tpu_custom_call.1} parent=1 // loop_footer
      %s19 = sadd.s32 1, %s15
    $region7: #{tpu_custom_call.1} parent=1 // loop_footer_branch
      %14 = sbr.rel target = $region3
    $region8: #{tpu_custom_call.1} parent=1 // loop_exit
      _
    %683 = vsyncpa [#allocation5], 1
    %s684 = scalar_lea.sflag [#allocation5], 1
    %685 = vsyncpa %s684, 1
    %686 = vsyncpa [#allocation6], 1
    %s687 = scalar_lea.sflag [#allocation6], 1
    %688 = vsyncpa %s687, 1

</llo_original>
